<compile_context>
chip_gen: v6e
topology: v6e:2x2x1
jax: 0.10.0
libtpu: 0.0.40
codegen_flags: <defaults>
</compile_context>

<pallas_src>
from functools import partial

import jax
import jax.numpy as jnp
from jax.experimental import pallas as pl
from jax.experimental.pallas import tpu as pltpu

# kanachan-style constants (sizes chosen small for the synthetic demo; the masking
# threshold NUM_TYPES_OF_ACTIONS keeps its real role).
MAX_NUM_ACTION_CANDIDATES = 32
NUM_TYPES_OF_ACTIONS = 219
ENCODER_WIDTH = 48  # only needs to be >= MAX_NUM_ACTION_CANDIDATES


def _activation(name, v):
    if name == "relu":
        return jnp.maximum(v, 0.0)
    # exact (erf) GELU, matching torch.nn.GELU default
    return 0.5 * v * (1.0 + jax.lax.erf(v * 0.7071067811865476))


def _theta_kernel(xt_ref, valid_ref, pool_ref, poolt_ref,
                  w0t_ref, b0_ref, wv1t_ref, bv1_ref, w1advt_ref, b1adv_ref,
                  theta_ref, *, activation, feedforward):
    F = feedforward
    xt = xt_ref[...]            # (D, tn)   model dim on sublanes, flat rows on lanes
    valid = valid_ref[...]      # (1, tn)   f32 {0,1} validity mask (lane-dense)

    # Fused hidden layer for the value head + all NQ advantage heads: one MXU pass.
    h = jnp.dot(w0t_ref[...], xt, preferred_element_type=jnp.float32) + b0_ref[...]
    h = _activation(activation, h)          # ((NQ+1)*F, tn) f32
    hc = h.astype(w0t_ref.dtype)            # matmul dtype for the ->1 projections

    # Value decoder output projection, then masked mean over each batch's candidates
    # via the small per-tile pooling matrix (replaces the old O(B^2) sel/selT trick).
    v_row = (jnp.dot(wv1t_ref[...], hc[:F, :], preferred_element_type=jnp.float32)
             + bv1_ref[...])                                                   # (1, tn)
    tot = jnp.dot(v_row * valid, poolt_ref[...], preferred_element_type=jnp.float32)  # (1, nb)
    cnt = jnp.dot(valid, poolt_ref[...], preferred_element_type=jnp.float32)          # (1, nb)
    # guard against zero valid candidates; reciprocal on the EUP slot
    value_b = tot * pl.reciprocal(jnp.maximum(cnt, 1.0), approx=False)                # (1, nb)
    value_row = jnp.dot(value_b, pool_ref[...], preferred_element_type=jnp.float32)   # (1, tn)

    # All NQ advantage heads in one batched (block-diagonal) output projection.
    adv = (jnp.dot(w1advt_ref[...], hc[F:, :], preferred_element_type=jnp.float32)
           + b1adv_ref[...])                                                   # (NQ, tn)

    q = value_row + adv                                                        # (NQ, tn)
    theta = jnp.where(valid > 0.5, q, -jnp.inf)
    theta_ref[...] = theta.astype(theta_ref.dtype)                             # lane-dense store


def init_params(key, dimension, dim_feedforward, num_qr_intervals, dtype=jnp.float32):
    ks = jax.random.split(key, 8)
    s = 0.1
    return dict(
        wv0=jax.random.normal(ks[0], (dimension, dim_feedforward), dtype) * s,
        bv0=jax.random.normal(ks[1], (1, dim_feedforward), dtype) * s,
        wv1=jax.random.normal(ks[2], (dim_feedforward, 1), dtype) * s,
        bv1=jax.random.normal(ks[3], (1, 1), dtype) * s,
        w0=jax.random.normal(ks[4], (num_qr_intervals, dimension, dim_feedforward), dtype) * s,
        b0=jax.random.normal(ks[5], (num_qr_intervals, 1, dim_feedforward), dtype) * s,
        w1=jax.random.normal(ks[6], (num_qr_intervals, dim_feedforward, 1), dtype) * s,
        b1=jax.random.normal(ks[7], (num_qr_intervals, 1, 1), dtype) * s,
    )


def theta_decoder_forward(candidates, encode, params, *, activation="relu",
                          matmul_dtype=jnp.float32, row_tile=None):
    B, maxc = candidates.shape
    assert maxc == MAX_NUM_ACTION_CANDIDATES
    _, W, D = encode.shape
    assert W == ENCODER_WIDTH
    N = B * maxc
    NQ, _, F = params["w0"].shape
    F_all = (NQ + 1) * F
    out_dtype = encode.dtype

    # ---- glue (plain JAX, outside the kernel) -------------------------------
    # Transposed layout: flat rows (b*maxc + m) on the lane axis everywhere.
    x_t = encode[:, -maxc:, :].reshape(N, D).T.astype(matmul_dtype)            # (D, N)
    valid_row = (candidates.reshape(1, N) < NUM_TYPES_OF_ACTIONS).astype(jnp.float32)  # (1, N)

    # Fused first layer: value-decoder hidden first, then the NQ advantage heads.
    w0t_all = jnp.concatenate(
        [params["wv0"].T] + [params["w0"][i].T for i in range(NQ)], axis=0
    ).astype(matmul_dtype)                                                     # (F_all, D)
    b0_all = jnp.concatenate(
        [params["bv0"][0]] + [params["b0"][i, 0] for i in range(NQ)], axis=0
    ).astype(jnp.float32).reshape(F_all, 1)                                    # (F_all, 1)

    wv1_t = params["wv1"].T.astype(matmul_dtype)                               # (1, F)
    bv1 = params["bv1"].astype(jnp.float32)                                    # (1, 1)
    eye = jnp.eye(NQ, dtype=params["w1"].dtype)
    w1adv_t = (eye[:, :, None] * params["w1"][:, :, 0][None]).reshape(NQ, NQ * F)
    w1adv_t = w1adv_t.astype(matmul_dtype)                                     # (NQ, NQ*F) block-diag
    b1adv = params["b1"][:, 0, :].astype(jnp.float32)                          # (NQ, 1)

    # ---- row tiling (whole batches per tile) --------------------------------
    if row_tile is None:
        if N <= 1024:
            row_tile = N
        else:
            row_tile = next((t for t in (1024, 512, 256, 128) if N % t == 0), N)
    tn = row_tile
    assert N % tn == 0 and tn % maxc == 0 and (tn == N or tn % 128 == 0)
    nb = tn // maxc  # batch rows per tile

    # Per-tile group-pooling matrix (constant, reused by every grid step).
    g = jax.lax.broadcasted_iota(jnp.int32, (nb, tn), 0)
    j = jax.lax.broadcasted_iota(jnp.int32, (nb, tn), 1)
    pool = (j // maxc == g).astype(jnp.float32)                                # (nb, tn)
    pool_t = pool.T                                                            # (tn, nb)

    # ---- explicit VMEM budget (2x double-buffering of blocked operands) -----
    mmb = jnp.dtype(matmul_dtype).itemsize
    blk_bytes = (D * tn * mmb + tn * 4 + 2 * nb * tn * 4
                 + F_all * D * mmb + F_all * 4
                 + F * mmb + 4 + NQ * NQ * F * mmb + NQ * 4
                 + NQ * tn * 4)
    interm_bytes = (F_all + NQ + 2) * tn * 4
    vmem_limit = int(min(max(2 * blk_bytes + 2 * interm_bytes + (4 << 20), 16 << 20), 64 << 20))

    const2 = lambda shape: pl.BlockSpec(shape, lambda i: (0, 0))
    grid_spec = pltpu.PrefetchScalarGridSpec(
        num_scalar_prefetch=0,
        grid=(N // tn,),
        in_specs=[
            pl.BlockSpec((D, tn), lambda i: (0, i)),   # x^T tile
            pl.BlockSpec((1, tn), lambda i: (0, i)),   # validity mask tile (lane-dense)
            const2((nb, tn)),                          # pooling matrix
            const2((tn, nb)),                          # pooling matrix^T
            const2((F_all, D)),                        # fused hidden-layer weights^T
            const2((F_all, 1)),                        # fused hidden-layer bias (tiny const)
            const2((1, F)),                            # value-decoder output weights^T
            const2((1, 1)),                            # value-decoder output bias
            const2((NQ, NQ * F)),                      # block-diag advantage output weights^T
            const2((NQ, 1)),                           # advantage output biases (tiny const)
        ],
        out_specs=pl.BlockSpec((NQ, tn), lambda i: (0, i)),
    )

    theta_t = pl.pallas_call(
        partial(_theta_kernel, activation=activation, feedforward=F),
        out_shape=jax.ShapeDtypeStruct((NQ, N), out_dtype),
        grid_spec=grid_spec,
        compiler_params=pltpu.CompilerParams(
            dimension_semantics=("parallel",),
            vmem_limit_bytes=vmem_limit),
    )(x_t, valid_row, pool, pool_t,
      w0t_all, b0_all, wv1_t, bv1, w1adv_t, b1adv)

    # glue: lane-dense (NQ, N) kernel output -> (B, MAX_NUM_ACTION_CANDIDATES, NQ)
    return theta_t.reshape(NQ, B, maxc).transpose(1, 2, 0)


def theta_decoder_reference(candidates, encode, params, *, activation="relu"):
    B, maxc = candidates.shape
    x = encode[:, -maxc:, :]
    valid = candidates < NUM_TYPES_OF_ACTIONS
    act = lambda v: _activation(activation, v)
    h = act(jnp.einsum("bmd,df->bmf", x, params["wv0"]) + params["bv0"][0])
    v = jnp.einsum("bmf,fo->bmo", h, params["wv1"])[..., 0] + params["bv1"][0, 0]
    v = jnp.where(valid, v, 0.0)
    value = v.sum(axis=1) / valid.sum(axis=1).astype(encode.dtype)
    outs = []
    for i in range(params["w0"].shape[0]):
        h = act(jnp.einsum("bmd,df->bmf", x, params["w0"][i]) + params["b0"][i, 0])
        a = jnp.einsum("bmf,fo->bmo", h, params["w1"][i])[..., 0] + params["b1"][i, 0, 0]
        q = value[:, None] + a
        outs.append(jnp.where(valid, q, -jnp.inf))
    return jnp.stack(outs, axis=-1)


if __name__ == "__main__":
    key = jax.random.PRNGKey(0)
    k1, k2, k3 = jax.random.split(key, 3)

    B = 2
    D = 32    # dimension
    F = 64    # dim_feedforward
    NQ = 4    # num_qr_intervals

    candidates = jax.random.randint(
        k1, (B, MAX_NUM_ACTION_CANDIDATES), 0, NUM_TYPES_OF_ACTIONS + 30)
    candidates = candidates.at[:, 0].set(0)  # ensure >=1 valid candidate per row
    encode = jax.random.normal(k2, (B, ENCODER_WIDTH, D), jnp.float32)
    params = init_params(k3, D, F, NQ)

    ref = theta_decoder_reference(candidates, encode, params, activation="relu")
    finite = jnp.isfinite(ref)

    # f32 matmul path — tight check
    theta = jax.block_until_ready(
        theta_decoder_forward(candidates, encode, params, activation="relu"))
    assert theta.shape == (B, MAX_NUM_ACTION_CANDIDATES, NQ)
    assert bool(jnp.array_equal(finite, jnp.isfinite(theta)))
    assert bool(jnp.allclose(jnp.where(finite, theta, 0.0),
                             jnp.where(finite, ref, 0.0),
                             atol=1e-4, rtol=1e-4))

    # bf16 matmul path (recommended on v6e/v7x) — looser check, mask/mean stay f32
    theta_bf16 = jax.block_until_ready(
        theta_decoder_forward(candidates, encode, params, activation="relu",
                              matmul_dtype=jnp.bfloat16))
    assert bool(jnp.array_equal(finite, jnp.isfinite(theta_bf16)))
    assert bool(jnp.allclose(jnp.where(finite, theta_bf16, 0.0),
                             jnp.where(finite, ref, 0.0),
                             atol=5e-2, rtol=5e-2))

    print("KERNEL_OK")
</pallas_src>

<mosaic_0001>
module attributes {stable_mosaic.version = 11 : i64} {
  func.func @_theta_kernel(%arg0: i32, %arg1: memref<32x64xf32, #tpu.memory_space<vmem>>, %arg2: memref<1x64xf32, #tpu.memory_space<vmem>>, %arg3: memref<2x64xf32, #tpu.memory_space<vmem>>, %arg4: memref<64x2xf32, #tpu.memory_space<vmem>>, %arg5: memref<320x32xf32, #tpu.memory_space<vmem>>, %arg6: memref<320x1xf32, #tpu.memory_space<vmem>>, %arg7: memref<1x64xf32, #tpu.memory_space<vmem>>, %arg8: memref<1x1xf32, #tpu.memory_space<vmem>>, %arg9: memref<4x256xf32, #tpu.memory_space<vmem>>, %arg10: memref<4x1xf32, #tpu.memory_space<vmem>>, %arg11: memref<4x64xf32, #tpu.memory_space<vmem>>) attributes {dimension_semantics = [#tpu.dimension_semantics<parallel>], iteration_bounds = array<i64: 1>, scalar_prefetch = 0 : i64, scratch_operands = 0 : i64, tpu.core_type = #tpu.core_type<tc>, window_params = [{transform_indices = @transform_0, window_bounds = array<i64: 32, 64>}, {transform_indices = @transform_1, window_bounds = array<i64: 1, 64>}, {pipeline_mode = #tpu.pipeline_mode<synchronous>, transform_indices = @transform_2, window_bounds = array<i64: 2, 64>}, {pipeline_mode = #tpu.pipeline_mode<synchronous>, transform_indices = @transform_3, window_bounds = array<i64: 64, 2>}, {pipeline_mode = #tpu.pipeline_mode<synchronous>, transform_indices = @transform_4, window_bounds = array<i64: 320, 32>}, {pipeline_mode = #tpu.pipeline_mode<synchronous>, transform_indices = @transform_5, window_bounds = array<i64: 320, 1>}, {pipeline_mode = #tpu.pipeline_mode<synchronous>, transform_indices = @transform_6, window_bounds = array<i64: 1, 64>}, {pipeline_mode = #tpu.pipeline_mode<synchronous>, transform_indices = @transform_7, window_bounds = array<i64: 1, 1>}, {pipeline_mode = #tpu.pipeline_mode<synchronous>, transform_indices = @transform_8, window_bounds = array<i64: 4, 256>}, {pipeline_mode = #tpu.pipeline_mode<synchronous>, transform_indices = @transform_9, window_bounds = array<i64: 4, 1>}, {transform_indices = @transform_10, window_bounds = array<i64: 4, 64>}]} {
    %c0 = arith.constant 0 : index
    %c0_0 = arith.constant 0 : index
    %0 = vector.load %arg1[%c0, %c0_0] : memref<32x64xf32, #tpu.memory_space<vmem>>, vector<32x64xf32>
    %c0_1 = arith.constant 0 : index
    %c0_2 = arith.constant 0 : index
    %1 = vector.load %arg2[%c0_1, %c0_2] : memref<1x64xf32, #tpu.memory_space<vmem>>, vector<1x64xf32>
    %c0_3 = arith.constant 0 : index
    %c0_4 = arith.constant 0 : index
    %2 = vector.load %arg5[%c0_3, %c0_4] : memref<320x32xf32, #tpu.memory_space<vmem>>, vector<320x32xf32>
    %cst = arith.constant dense<0.000000e+00> : vector<320x64xf32>
    %3 = tpu.matmul %2, %0, %cst {dimension_numbers = #tpu.dot_dimension_numbers<[1], [0], [0], [1], [0, 0, 1, 1], [], []>} : vector<320x32xf32>, vector<32x64xf32>, vector<320x64xf32> -> vector<320x64xf32>
    %c0_5 = arith.constant 0 : index
    %c0_6 = arith.constant 0 : index
    %4 = vector.load %arg6[%c0_5, %c0_6] : memref<320x1xf32, #tpu.memory_space<vmem>>, vector<320x1xf32>
    %5 = vector.broadcast %4 : vector<320x1xf32> to vector<320x64xf32>
    %6 = arith.addf %3, %5 : vector<320x64xf32>
    %cst_7 = arith.constant 0.000000e+00 : f32
    %7 = vector.broadcast %cst_7 : f32 to vector<320x64xf32>
    %8 = arith.maximumf %6, %7 : vector<320x64xf32>
    %c0_8 = arith.constant 0 : index
    %c0_9 = arith.constant 0 : index
    %9 = vector.load %arg7[%c0_8, %c0_9] : memref<1x64xf32, #tpu.memory_space<vmem>>, vector<1x64xf32>
    %10 = vector.extract_strided_slice %8 {offsets = [0, 0], sizes = [64, 64], strides = [1, 1]} : vector<320x64xf32> to vector<64x64xf32>
    %cst_10 = arith.constant dense<0.000000e+00> : vector<1x64xf32>
    %11 = tpu.matmul %9, %10, %cst_10 {dimension_numbers = #tpu.dot_dimension_numbers<[1], [0], [0], [1], [0, 0, 1, 1], [], []>} : vector<1x64xf32>, vector<64x64xf32>, vector<1x64xf32> -> vector<1x64xf32>
    %c0_11 = arith.constant 0 : index
    %c0_12 = arith.constant 0 : index
    %12 = vector.load %arg8[%c0_11, %c0_12] : memref<1x1xf32, #tpu.memory_space<vmem>>, vector<1x1xf32>
    %13 = vector.broadcast %12 : vector<1x1xf32> to vector<1x64xf32>
    %14 = arith.addf %11, %13 : vector<1x64xf32>
    %15 = arith.mulf %14, %1 : vector<1x64xf32>
    %c0_13 = arith.constant 0 : index
    %c0_14 = arith.constant 0 : index
    %16 = vector.load %arg4[%c0_13, %c0_14] : memref<64x2xf32, #tpu.memory_space<vmem>>, vector<64x2xf32>
    %cst_15 = arith.constant dense<0.000000e+00> : vector<1x2xf32>
    %17 = tpu.matmul %15, %16, %cst_15 {dimension_numbers = #tpu.dot_dimension_numbers<[1], [0], [0], [1], [0, 0, 1, 1], [], []>} : vector<1x64xf32>, vector<64x2xf32>, vector<1x2xf32> -> vector<1x2xf32>
    %c0_16 = arith.constant 0 : index
    %c0_17 = arith.constant 0 : index
    %18 = vector.load %arg4[%c0_16, %c0_17] : memref<64x2xf32, #tpu.memory_space<vmem>>, vector<64x2xf32>
    %cst_18 = arith.constant dense<0.000000e+00> : vector<1x2xf32>
    %19 = tpu.matmul %1, %18, %cst_18 {dimension_numbers = #tpu.dot_dimension_numbers<[1], [0], [0], [1], [0, 0, 1, 1], [], []>} : vector<1x64xf32>, vector<64x2xf32>, vector<1x2xf32> -> vector<1x2xf32>
    %cst_19 = arith.constant 1.000000e+00 : f32
    %20 = vector.broadcast %cst_19 : f32 to vector<1x2xf32>
    %21 = arith.maximumf %19, %20 : vector<1x2xf32>
    %22 = tpu.reciprocal %21 : vector<1x2xf32> -> vector<1x2xf32>
    %23 = arith.mulf %17, %22 : vector<1x2xf32>
    %c0_20 = arith.constant 0 : index
    %c0_21 = arith.constant 0 : index
    %24 = vector.load %arg3[%c0_20, %c0_21] : memref<2x64xf32, #tpu.memory_space<vmem>>, vector<2x64xf32>
    %cst_22 = arith.constant dense<0.000000e+00> : vector<1x64xf32>
    %25 = tpu.matmul %23, %24, %cst_22 {dimension_numbers = #tpu.dot_dimension_numbers<[1], [0], [0], [1], [0, 0, 1, 1], [], []>} : vector<1x2xf32>, vector<2x64xf32>, vector<1x64xf32> -> vector<1x64xf32>
    %c0_23 = arith.constant 0 : index
    %c0_24 = arith.constant 0 : index
    %26 = vector.load %arg9[%c0_23, %c0_24] : memref<4x256xf32, #tpu.memory_space<vmem>>, vector<4x256xf32>
    %27 = vector.extract_strided_slice %8 {offsets = [64, 0], sizes = [256, 64], strides = [1, 1]} : vector<320x64xf32> to vector<256x64xf32>
    %cst_25 = arith.constant dense<0.000000e+00> : vector<4x64xf32>
    %28 = tpu.matmul %26, %27, %cst_25 {dimension_numbers = #tpu.dot_dimension_numbers<[1], [0], [0], [1], [0, 0, 1, 1], [], []>} : vector<4x256xf32>, vector<256x64xf32>, vector<4x64xf32> -> vector<4x64xf32>
    %c0_26 = arith.constant 0 : index
    %c0_27 = arith.constant 0 : index
    %29 = vector.load %arg10[%c0_26, %c0_27] : memref<4x1xf32, #tpu.memory_space<vmem>>, vector<4x1xf32>
    %30 = vector.broadcast %29 : vector<4x1xf32> to vector<4x64xf32>
    %31 = arith.addf %28, %30 : vector<4x64xf32>
    %32 = vector.broadcast %25 : vector<1x64xf32> to vector<4x64xf32>
    %33 = arith.addf %32, %31 : vector<4x64xf32>
    %cst_28 = arith.constant 5.000000e-01 : f32
    %34 = vector.broadcast %cst_28 : f32 to vector<1x64xf32>
    %35 = arith.cmpf ogt, %1, %34 : vector<1x64xf32>
    %cst_29 = arith.constant 0xFF800000 : f32
    %36 = vector.shape_cast %35 : vector<1x64xi1> to vector<1x64xi1>
    %37 = vector.broadcast %36 : vector<1x64xi1> to vector<4x64xi1>
    %38 = vector.broadcast %cst_29 : f32 to vector<4x64xf32>
    %39 = arith.select %37, %33, %38 : vector<4x64xi1>, vector<4x64xf32>
    %c0_30 = arith.constant 0 : index
    %c0_31 = arith.constant 0 : index
    %40 = vector.load %arg11[%c0_30, %c0_31] : memref<4x64xf32, #tpu.memory_space<vmem>>, vector<4x64xf32>
    tpu.vector_store %arg11[%c0_30, %c0_31], %39 {strides = array<i32>} : memref<4x64xf32, #tpu.memory_space<vmem>>, vector<4x64xf32>,
    return
  }
  func.func @transform_0(%arg0: i32) -> (i32, i32) {
    %c0_i32 = arith.constant 0 : i32
    %c0_i32_0 = arith.constant 0 : i32
    return %c0_i32, %arg0 : i32, i32
  }
  func.func @transform_1(%arg0: i32) -> (i32, i32) {
    %c0_i32 = arith.constant 0 : i32
    %c0_i32_0 = arith.constant 0 : i32
    return %c0_i32, %arg0 : i32, i32
  }
  func.func @transform_2(%arg0: i32) -> (i32, i32) {
    %c0_i32 = arith.constant 0 : i32
    %c0_i32_0 = arith.constant 0 : i32
    %c0_i32_1 = arith.constant 0 : i32
    return %c0_i32, %c0_i32_0 : i32, i32
  }
  func.func @transform_3(%arg0: i32) -> (i32, i32) {
    %c0_i32 = arith.constant 0 : i32
    %c0_i32_0 = arith.constant 0 : i32
    %c0_i32_1 = arith.constant 0 : i32
    return %c0_i32, %c0_i32_0 : i32, i32
  }
  func.func @transform_4(%arg0: i32) -> (i32, i32) {
    %c0_i32 = arith.constant 0 : i32
    %c0_i32_0 = arith.constant 0 : i32
    %c0_i32_1 = arith.constant 0 : i32
    return %c0_i32, %c0_i32_0 : i32, i32
  }
  func.func @transform_5(%arg0: i32) -> (i32, i32) {
    %c0_i32 = arith.constant 0 : i32
    %c0_i32_0 = arith.constant 0 : i32
    %c0_i32_1 = arith.constant 0 : i32
    return %c0_i32, %c0_i32_0 : i32, i32
  }
  func.func @transform_6(%arg0: i32) -> (i32, i32) {
    %c0_i32 = arith.constant 0 : i32
    %c0_i32_0 = arith.constant 0 : i32
    %c0_i32_1 = arith.constant 0 : i32
    return %c0_i32, %c0_i32_0 : i32, i32
  }
  func.func @transform_7(%arg0: i32) -> (i32, i32) {
    %c0_i32 = arith.constant 0 : i32
    %c0_i32_0 = arith.constant 0 : i32
    %c0_i32_1 = arith.constant 0 : i32
    return %c0_i32, %c0_i32_0 : i32, i32
  }
  func.func @transform_8(%arg0: i32) -> (i32, i32) {
    %c0_i32 = arith.constant 0 : i32
    %c0_i32_0 = arith.constant 0 : i32
    %c0_i32_1 = arith.constant 0 : i32
    return %c0_i32, %c0_i32_0 : i32, i32
  }
  func.func @transform_9(%arg0: i32) -> (i32, i32) {
    %c0_i32 = arith.constant 0 : i32
    %c0_i32_0 = arith.constant 0 : i32
    %c0_i32_1 = arith.constant 0 : i32
    return %c0_i32, %c0_i32_0 : i32, i32
  }
  func.func @transform_10(%arg0: i32) -> (i32, i32) {
    %c0_i32 = arith.constant 0 : i32
    %c0_i32_0 = arith.constant 0 : i32
    return %c0_i32, %arg0 : i32, i32
  }
}

</mosaic_0001>

<llo_original>
// kernel: tpu_custom_call.1
$region0: #{tpu_custom_call.1}
  #allocation0 [shape = 'u32[]', space=smem, size = 0x4, offset = 0x4, fixed_abs, tag = 'smem constant byte address 0x4 - core index']
  #allocation1 [shape = 'u32[144,128]{1,0:T(1,128)}', space=vmem, size = 0x12000, scoped, tag = 'internal scratch']
  #allocation2 [shape = 'f32[1,1]{1,0:T(1,128)S(1)}', space=vmem, size = 0x200, scoped, tag = 'scoped memory for tpu_custom_call.1']
  %s0 = inlined_call_operand.vmem [shape: f32[32,64], index: 0, kind: input, shape index: {}]
  %s1 = inlined_call_operand.vmem [shape: f32[1,64], index: 1, kind: input, shape index: {}]
  %s2 = inlined_call_operand.vmem [shape: f32[2,64], index: 2, kind: input, shape index: {}]
  %s3 = inlined_call_operand.vmem [shape: f32[64,2], index: 3, kind: input, shape index: {}]
  %s4 = inlined_call_operand.vmem [shape: f32[320,32], index: 4, kind: input, shape index: {}]
  %s5 = inlined_call_operand.vmem [shape: f32[320,1], index: 5, kind: input, shape index: {}]
  %s6 = inlined_call_operand.vmem [shape: f32[1,64], index: 6, kind: input, shape index: {}]
  %s7 = inlined_call_operand.<no memory space> [shape: f32[1,1], index: 7, kind: input, shape index: {}]
  %s8 = inlined_call_operand.vmem [shape: f32[4,256], index: 8, kind: input, shape index: {}]
  %s9 = inlined_call_operand.vmem [shape: f32[4,1], index: 9, kind: input, shape index: {}]
  %s10 = inlined_call_operand.hbm [shape: f32[4,64], index: 10, kind: output, shape index: {}]
  %s11 = sld [smem:[#allocation0]]
  $region50: #{tpu_custom_call.1} parent=0
    _
  %s13 = ssub.s32 1, %s11
  %s14 = scalar_select 0, %s13, %s11
  %v15 = vstv %s7
  %16 = vst [vmem:[#allocation2] sm:$0x1] %v15
  $region1: #{tpu_custom_call.1} parent=0
    #allocation3 [shape = 'u8[2048]{0}', space=vmem, size = 0x800, scoped, tag = 'output window, operand 0, single buffered']
    #allocation4 [shape = 's32[1]{0}', space=sflag, size = 0x4, scoped, tag = 'scoped memory for tpu_custom_call.1']
    %17 = vsyncpa [#allocation4], 0
    // Predicated region
    $region2: #{tpu_custom_call.1} parent=1 // pred_check
      _
    $region3: #{tpu_custom_call.1} parent=1 // pred_check_branch
      %19 = sbr.rel (0) target = $region5
    $region4: #{tpu_custom_call.1} parent=1 // pred_region
      _
    $region5: #{tpu_custom_call.1} parent=1 // pred_fallthru
      _
    // Predicated region
    $region6: #{tpu_custom_call.1} parent=1 // pred_check
      _
    $region7: #{tpu_custom_call.1} parent=1 // pred_check_branch
      %21 = sbr.rel (0) target = $region9
    $region8: #{tpu_custom_call.1} parent=1 // pred_region
      _
    $region9: #{tpu_custom_call.1} parent=1 // pred_fallthru
      _
    // Predicated region
    $region10: #{tpu_custom_call.1} parent=1 // pred_check
      _
    $region11: #{tpu_custom_call.1} parent=1 // pred_check_branch
      %23 = sbr.rel (0) target = $region13
    $region12: #{tpu_custom_call.1} parent=1 // pred_region
      _
    $region13: #{tpu_custom_call.1} parent=1 // pred_fallthru
      _
    // Predicated region
    $region14: #{tpu_custom_call.1} parent=1 // pred_check
      _
    $region15: #{tpu_custom_call.1} parent=1 // pred_check_branch
      %25 = sbr.rel (0) target = $region17
    $region16: #{tpu_custom_call.1} parent=1 // pred_region
      _
    $region17: #{tpu_custom_call.1} parent=1 // pred_fallthru
      _
    // Predicated region
    $region18: #{tpu_custom_call.1} parent=1 // pred_check
      _
    $region19: #{tpu_custom_call.1} parent=1 // pred_check_branch
      %27 = sbr.rel (0) target = $region21
    $region20: #{tpu_custom_call.1} parent=1 // pred_region
      _
    $region21: #{tpu_custom_call.1} parent=1 // pred_fallthru
      _
    // Predicated region
    $region22: #{tpu_custom_call.1} parent=1 // pred_check
      _
    $region23: #{tpu_custom_call.1} parent=1 // pred_check_branch
      %29 = sbr.rel (0) target = $region25
    $region24: #{tpu_custom_call.1} parent=1 // pred_region
      _
    $region25: #{tpu_custom_call.1} parent=1 // pred_fallthru
      _
    // Predicated region
    $region26: #{tpu_custom_call.1} parent=1 // pred_check
      _
    $region27: #{tpu_custom_call.1} parent=1 // pred_check_branch
      %31 = sbr.rel (0) target = $region29
    $region28: #{tpu_custom_call.1} parent=1 // pred_region
      _
    $region29: #{tpu_custom_call.1} parent=1 // pred_fallthru
      _
    // Predicated region
    $region30: #{tpu_custom_call.1} parent=1 // pred_check
      _
    $region31: #{tpu_custom_call.1} parent=1 // pred_check_branch
      %33 = sbr.rel (0) target = $region33
    $region32: #{tpu_custom_call.1} parent=1 // pred_region
      _
    $region33: #{tpu_custom_call.1} parent=1 // pred_fallthru
      _
    // Predicated region
    $region34: #{tpu_custom_call.1} parent=1 // pred_check
      _
    $region35: #{tpu_custom_call.1} parent=1 // pred_check_branch
      %35 = sbr.rel (0) target = $region37
    $region36: #{tpu_custom_call.1} parent=1 // pred_region
      _
    $region37: #{tpu_custom_call.1} parent=1 // pred_fallthru
      _
    // Predicated region
    $region38: #{tpu_custom_call.1} parent=1 // pred_check
      _
    $region39: #{tpu_custom_call.1} parent=1 // pred_check_branch
      %37 = sbr.rel (0) target = $region41
    $region40: #{tpu_custom_call.1} parent=1 // pred_region
      _
    $region41: #{tpu_custom_call.1} parent=1 // pred_fallthru
      _
    %v38 = vld [vmem:[%s0] sm:$0xff]
    %v39 = vld [vmem:[%s0 + $0x8] sm:$0xff]
    %v40 = vld [vmem:[%s0 + $0x10] sm:$0xff]
    %v41 = vld [vmem:[%s0 + $0x18] sm:$0xff]
    %v42 = vld [vmem:[%s1] sm:$0x1]
    %v43 = vld [vmem:[%s4] sm:$0xff]
    %v44 = vld [vmem:[%s4 + $0x8] sm:$0xff]
    %v45 = vld [vmem:[%s4 + $0x10] sm:$0xff]
    %v46 = vld [vmem:[%s4 + $0x18] sm:$0xff]
    %v47 = vld [vmem:[%s4 + $0x20] sm:$0xff]
    %v48 = vld [vmem:[%s4 + $0x28] sm:$0xff]
    %v49 = vld [vmem:[%s4 + $0x30] sm:$0xff]
    %v50 = vld [vmem:[%s4 + $0x38] sm:$0xff]
    %v51 = vld [vmem:[%s4 + $0x40] sm:$0xff]
    %v52 = vld [vmem:[%s4 + $0x48] sm:$0xff]
    %v53 = vld [vmem:[%s4 + $0x50] sm:$0xff]
    %v54 = vld [vmem:[%s4 + $0x58] sm:$0xff]
    %v55 = vld [vmem:[%s4 + $0x60] sm:$0xff]
    %v56 = vld [vmem:[%s4 + $0x68] sm:$0xff]
    %v57 = vld [vmem:[%s4 + $0x70] sm:$0xff]
    %v58 = vld [vmem:[%s4 + $0x78] sm:$0xff]
    %v59 = vld [vmem:[%s4 + $0x80] sm:$0xff]
    %v60 = vld [vmem:[%s4 + $0x88] sm:$0xff]
    %v61 = vld [vmem:[%s4 + $0x90] sm:$0xff]
    %v62 = vld [vmem:[%s4 + $0x98] sm:$0xff]
    %v63 = vld [vmem:[%s4 + $0xa0] sm:$0xff]
    %v64 = vld [vmem:[%s4 + $0xa8] sm:$0xff]
    %v65 = vld [vmem:[%s4 + $0xb0] sm:$0xff]
    %v66 = vld [vmem:[%s4 + $0xb8] sm:$0xff]
    %v67 = vld [vmem:[%s4 + $0xc0] sm:$0xff]
    %v68 = vld [vmem:[%s4 + $0xc8] sm:$0xff]
    %v69 = vld [vmem:[%s4 + $0xd0] sm:$0xff]
    %v70 = vld [vmem:[%s4 + $0xd8] sm:$0xff]
    %v71 = vld [vmem:[%s4 + $0xe0] sm:$0xff]
    %v72 = vld [vmem:[%s4 + $0xe8] sm:$0xff]
    %v73 = vld [vmem:[%s4 + $0xf0] sm:$0xff]
    %v74 = vld [vmem:[%s4 + $0xf8] sm:$0xff]
    %v75 = vld [vmem:[%s4 + $0x100] sm:$0xff]
    %v76 = vld [vmem:[%s4 + $0x108] sm:$0xff]
    %v77 = vld [vmem:[%s4 + $0x110] sm:$0xff]
    %v78 = vld [vmem:[%s4 + $0x118] sm:$0xff]
    %v79 = vld [vmem:[%s4 + $0x120] sm:$0xff]
    %v80 = vld [vmem:[%s4 + $0x128] sm:$0xff]
    %v81 = vld [vmem:[%s4 + $0x130] sm:$0xff]
    %v82 = vld [vmem:[%s4 + $0x138] sm:$0xff]
    %v83 = vld [vmem:[%s5] sm:$0xff]
    %v84 = vld [vmem:[%s5 + $0x8] sm:$0xff]
    %v85 = vld [vmem:[%s5 + $0x10] sm:$0xff]
    %v86 = vld [vmem:[%s5 + $0x18] sm:$0xff]
    %v87 = vld [vmem:[%s5 + $0x20] sm:$0xff]
    %v88 = vld [vmem:[%s5 + $0x28] sm:$0xff]
    %v89 = vld [vmem:[%s5 + $0x30] sm:$0xff]
    %v90 = vld [vmem:[%s5 + $0x38] sm:$0xff]
    %v91 = vld [vmem:[%s5 + $0x40] sm:$0xff]
    %v92 = vld [vmem:[%s5 + $0x48] sm:$0xff]
    %v93 = vld [vmem:[%s5 + $0x50] sm:$0xff]
    %v94 = vld [vmem:[%s5 + $0x58] sm:$0xff]
    %v95 = vld [vmem:[%s5 + $0x60] sm:$0xff]
    %v96 = vld [vmem:[%s5 + $0x68] sm:$0xff]
    %v97 = vld [vmem:[%s5 + $0x70] sm:$0xff]
    %v98 = vld [vmem:[%s5 + $0x78] sm:$0xff]
    %v99 = vld [vmem:[%s5 + $0x80] sm:$0xff]
    %v100 = vld [vmem:[%s5 + $0x88] sm:$0xff]
    %v101 = vld [vmem:[%s5 + $0x90] sm:$0xff]
    %v102 = vld [vmem:[%s5 + $0x98] sm:$0xff]
    %v103 = vld [vmem:[%s5 + $0xa0] sm:$0xff]
    %v104 = vld [vmem:[%s5 + $0xa8] sm:$0xff]
    %v105 = vld [vmem:[%s5 + $0xb0] sm:$0xff]
    %v106 = vld [vmem:[%s5 + $0xb8] sm:$0xff]
    %v107 = vld [vmem:[%s5 + $0xc0] sm:$0xff]
    %v108 = vld [vmem:[%s5 + $0xc8] sm:$0xff]
    %v109 = vld [vmem:[%s5 + $0xd0] sm:$0xff]
    %v110 = vld [vmem:[%s5 + $0xd8] sm:$0xff]
    %v111 = vld [vmem:[%s5 + $0xe0] sm:$0xff]
    %v112 = vld [vmem:[%s5 + $0xe8] sm:$0xff]
    %v113 = vld [vmem:[%s5 + $0xf0] sm:$0xff]
    %v114 = vld [vmem:[%s5 + $0xf8] sm:$0xff]
    %v115 = vld [vmem:[%s5 + $0x100] sm:$0xff]
    %v116 = vld [vmem:[%s5 + $0x108] sm:$0xff]
    %v117 = vld [vmem:[%s5 + $0x110] sm:$0xff]
    %v118 = vld [vmem:[%s5 + $0x118] sm:$0xff]
    %v119 = vld [vmem:[%s5 + $0x120] sm:$0xff]
    %v120 = vld [vmem:[%s5 + $0x128] sm:$0xff]
    %v121 = vld [vmem:[%s5 + $0x130] sm:$0xff]
    %v122 = vld [vmem:[%s5 + $0x138] sm:$0xff]
    %124 = vset.pattern.permute.xlu0 0
    %125 = vperm.xlu0 %124, %v83
    %v126 = vpop.permute.xlu0 %125
    %129 = vset.pattern.permute.xlu0 0
    %130 = vperm.xlu0 %129, %v84
    %v131 = vpop.permute.xlu0 %130
    %134 = vset.pattern.permute.xlu0 0
    %135 = vperm.xlu0 %134, %v85
    %v136 = vpop.permute.xlu0 %135
    %139 = vset.pattern.permute.xlu0 0
    %140 = vperm.xlu0 %139, %v86
    %v141 = vpop.permute.xlu0 %140
    %144 = vset.pattern.permute.xlu0 0
    %145 = vperm.xlu0 %144, %v87
    %v146 = vpop.permute.xlu0 %145
    %149 = vset.pattern.permute.xlu0 0
    %150 = vperm.xlu0 %149, %v88
    %v151 = vpop.permute.xlu0 %150
    %154 = vset.pattern.permute.xlu0 0
    %155 = vperm.xlu0 %154, %v89
    %v156 = vpop.permute.xlu0 %155
    %159 = vset.pattern.permute.xlu0 0
    %160 = vperm.xlu0 %159, %v90
    %v161 = vpop.permute.xlu0 %160
    %164 = vset.pattern.permute.xlu0 0
    %165 = vperm.xlu0 %164, %v91
    %v166 = vpop.permute.xlu0 %165
    %169 = vset.pattern.permute.xlu0 0
    %170 = vperm.xlu0 %169, %v92
    %v171 = vpop.permute.xlu0 %170
    %174 = vset.pattern.permute.xlu0 0
    %175 = vperm.xlu0 %174, %v93
    %v176 = vpop.permute.xlu0 %175
    %179 = vset.pattern.permute.xlu0 0
    %180 = vperm.xlu0 %179, %v94
    %v181 = vpop.permute.xlu0 %180
    %184 = vset.pattern.permute.xlu0 0
    %185 = vperm.xlu0 %184, %v95
    %v186 = vpop.permute.xlu0 %185
    %189 = vset.pattern.permute.xlu0 0
    %190 = vperm.xlu0 %189, %v96
    %v191 = vpop.permute.xlu0 %190
    %194 = vset.pattern.permute.xlu0 0
    %195 = vperm.xlu0 %194, %v97
    %v196 = vpop.permute.xlu0 %195
    %199 = vset.pattern.permute.xlu0 0
    %200 = vperm.xlu0 %199, %v98
    %v201 = vpop.permute.xlu0 %200
    %204 = vset.pattern.permute.xlu0 0
    %205 = vperm.xlu0 %204, %v99
    %v206 = vpop.permute.xlu0 %205
    %209 = vset.pattern.permute.xlu0 0
    %210 = vperm.xlu0 %209, %v100
    %v211 = vpop.permute.xlu0 %210
    %214 = vset.pattern.permute.xlu0 0
    %215 = vperm.xlu0 %214, %v101
    %v216 = vpop.permute.xlu0 %215
    %219 = vset.pattern.permute.xlu0 0
    %220 = vperm.xlu0 %219, %v102
    %v221 = vpop.permute.xlu0 %220
    %224 = vset.pattern.permute.xlu0 0
    %225 = vperm.xlu0 %224, %v103
    %v226 = vpop.permute.xlu0 %225
    %229 = vset.pattern.permute.xlu0 0
    %230 = vperm.xlu0 %229, %v104
    %v231 = vpop.permute.xlu0 %230
    %234 = vset.pattern.permute.xlu0 0
    %235 = vperm.xlu0 %234, %v105
    %v236 = vpop.permute.xlu0 %235
    %239 = vset.pattern.permute.xlu0 0
    %240 = vperm.xlu0 %239, %v106
    %v241 = vpop.permute.xlu0 %240
    %244 = vset.pattern.permute.xlu0 0
    %245 = vperm.xlu0 %244, %v107
    %v246 = vpop.permute.xlu0 %245
    %249 = vset.pattern.permute.xlu0 0
    %250 = vperm.xlu0 %249, %v108
    %v251 = vpop.permute.xlu0 %250
    %254 = vset.pattern.permute.xlu0 0
    %255 = vperm.xlu0 %254, %v109
    %v256 = vpop.permute.xlu0 %255
    %259 = vset.pattern.permute.xlu0 0
    %260 = vperm.xlu0 %259, %v110
    %v261 = vpop.permute.xlu0 %260
    %264 = vset.pattern.permute.xlu0 0
    %265 = vperm.xlu0 %264, %v111
    %v266 = vpop.permute.xlu0 %265
    %269 = vset.pattern.permute.xlu0 0
    %270 = vperm.xlu0 %269, %v112
    %v271 = vpop.permute.xlu0 %270
    %274 = vset.pattern.permute.xlu0 0
    %275 = vperm.xlu0 %274, %v113
    %v276 = vpop.permute.xlu0 %275
    %279 = vset.pattern.permute.xlu0 0
    %280 = vperm.xlu0 %279, %v114
    %v281 = vpop.permute.xlu0 %280
    %284 = vset.pattern.permute.xlu0 0
    %285 = vperm.xlu0 %284, %v115
    %v286 = vpop.permute.xlu0 %285
    %289 = vset.pattern.permute.xlu0 0
    %290 = vperm.xlu0 %289, %v116
    %v291 = vpop.permute.xlu0 %290
    %294 = vset.pattern.permute.xlu0 0
    %295 = vperm.xlu0 %294, %v117
    %v296 = vpop.permute.xlu0 %295
    %299 = vset.pattern.permute.xlu0 0
    %300 = vperm.xlu0 %299, %v118
    %v301 = vpop.permute.xlu0 %300
    %304 = vset.pattern.permute.xlu0 0
    %305 = vperm.xlu0 %304, %v119
    %v306 = vpop.permute.xlu0 %305
    %309 = vset.pattern.permute.xlu0 0
    %310 = vperm.xlu0 %309, %v120
    %v311 = vpop.permute.xlu0 %310
    %314 = vset.pattern.permute.xlu0 0
    %315 = vperm.xlu0 %314, %v121
    %v316 = vpop.permute.xlu0 %315
    %319 = vset.pattern.permute.xlu0 0
    %320 = vperm.xlu0 %319, %v122
    %v321 = vpop.permute.xlu0 %320
    %vm323 = vcmask 261120
    %v325 = vsel %vm323, %v43, 0
    %v328 = vsel %vm323, %v44, 0
    %v331 = vsel %vm323, %v45, 0
    %v334 = vsel %vm323, %v46, 0
    %v337 = vsel %vm323, %v47, 0
    %v340 = vsel %vm323, %v48, 0
    %v343 = vsel %vm323, %v49, 0
    %v346 = vsel %vm323, %v50, 0
    %v349 = vsel %vm323, %v51, 0
    %v352 = vsel %vm323, %v52, 0
    %v355 = vsel %vm323, %v53, 0
    %v358 = vsel %vm323, %v54, 0
    %v361 = vsel %vm323, %v55, 0
    %v364 = vsel %vm323, %v56, 0
    %v367 = vsel %vm323, %v57, 0
    %v370 = vsel %vm323, %v58, 0
    %v373 = vsel %vm323, %v59, 0
    %v376 = vsel %vm323, %v60, 0
    %v379 = vsel %vm323, %v61, 0
    %v382 = vsel %vm323, %v62, 0
    %v385 = vsel %vm323, %v63, 0
    %v388 = vsel %vm323, %v64, 0
    %v391 = vsel %vm323, %v65, 0
    %v394 = vsel %vm323, %v66, 0
    %v397 = vsel %vm323, %v67, 0
    %v400 = vsel %vm323, %v68, 0
    %v403 = vsel %vm323, %v69, 0
    %v406 = vsel %vm323, %v70, 0
    %v409 = vsel %vm323, %v71, 0
    %v412 = vsel %vm323, %v72, 0
    %v415 = vsel %vm323, %v73, 0
    %v418 = vsel %vm323, %v74, 0
    %v421 = vsel %vm323, %v75, 0
    %v424 = vsel %vm323, %v76, 0
    %v427 = vsel %vm323, %v77, 0
    %v430 = vsel %vm323, %v78, 0
    %v433 = vsel %vm323, %v79, 0
    %v436 = vsel %vm323, %v80, 0
    %v439 = vsel %vm323, %v81, 0
    %v442 = vsel %vm323, %v82, 0
    %444 = vmatprep.subr.mxu0 0.0
    %445 = vmatpush1.msra.mxu0 0.0
    %446 = vmatprep.subr.mxu0 0.0
    %447 = vmatpush1.msra.mxu0 0.0
    %448 = vmatprep.subr.mxu0 0.0
    %449 = vmatpush1.msra.mxu0 0.0
    %450 = vmatprep.subr.mxu0 0.0
    %451 = vmatpush1.msra.mxu0 0.0
    %452 = vmatprep.subr.mxu0 0.0
    %453 = vmatpush1.msra.mxu0 0.0
    %454 = vmatprep.subr.mxu0 0.0
    %455 = vmatpush1.msra.mxu0 0.0
    %456 = vmatprep.subr.mxu0 0.0
    %457 = vmatpush1.msra.mxu0 0.0
    %458 = vmatprep.subr.mxu0 0.0
    %459 = vmatpush1.msra.mxu0 0.0
    %460 = vmatprep.subr.mxu0 0.0
    %461 = vmatpush1.msra.mxu0 0.0
    %462 = vmatprep.subr.mxu0 0.0
    %463 = vmatpush1.msra.mxu0 0.0
    %464 = vmatprep.subr.mxu0 0.0
    %465 = vmatpush1.msra.mxu0 0.0
    %466 = vmatprep.subr.mxu0 0.0
    %467 = vmatpush1.msra.mxu0 0.0
    %468 = vmatprep.subr.mxu0 0.0
    %469 = vmatpush1.msra.mxu0 %v41
    %470 = vmatprep.subr.mxu0 0.0
    %471 = vmatpush1.msra.mxu0 %v40
    %472 = vmatprep.subr.mxu0 0.0
    %473 = vmatpush1.msra.mxu0 %v39
    %474 = vmatprep.subr.mxu0 0.0
    %475 = vmatpush1.msra.mxu0 %v38
    %476 = vmatprep.subr.mxu0 0.0
    %477 = vmatpush2.msra.mxu0 0.0
    %478 = vmatprep.subr.mxu0 0.0
    %479 = vmatpush2.msra.mxu0 0.0
    %480 = vmatprep.subr.mxu0 0.0
    %481 = vmatpush2.msra.mxu0 0.0
    %482 = vmatprep.subr.mxu0 0.0
    %483 = vmatpush2.msra.mxu0 0.0
    %484 = vmatprep.subr.mxu0 0.0
    %485 = vmatpush2.msra.mxu0 0.0
    %486 = vmatprep.subr.mxu0 0.0
    %487 = vmatpush2.msra.mxu0 0.0
    %488 = vmatprep.subr.mxu0 0.0
    %489 = vmatpush2.msra.mxu0 0.0
    %490 = vmatprep.subr.mxu0 0.0
    %491 = vmatpush2.msra.mxu0 0.0
    %492 = vmatprep.subr.mxu0 0.0
    %493 = vmatpush2.msra.mxu0 0.0
    %494 = vmatprep.subr.mxu0 0.0
    %495 = vmatpush2.msra.mxu0 0.0
    %496 = vmatprep.subr.mxu0 0.0
    %497 = vmatpush2.msra.mxu0 0.0
    %498 = vmatprep.subr.mxu0 0.0
    %499 = vmatpush2.msra.mxu0 0.0
    %500 = vmatprep.subr.mxu0 0.0
    %501 = vmatpush2.msra.mxu0 0.0
    %502 = vmatprep.subr.mxu0 0.0
    %503 = vmatpush2.msra.mxu0 0.0
    %504 = vmatprep.subr.mxu0 0.0
    %505 = vmatpush2.msra.mxu0 0.0
    %506 = vmatprep.subr.mxu0 0.0
    %507 = vmatpush2.msra.mxu0 0.0
    %508 = vmatprep.mubr.f32.mxu0 0.0
    %509 = vmatmul.mubr.f32.gmra.mxu0 %v325
    %v510 = vpop.f32.mrf.mxu0
    %v511 = vadd.f32 %v126, %v510
    %v512 = vpop.f32.mrf.mxu0
    %513 = vmatprep.mubr.f32.mxu0 0.0
    %514 = vmatmul.mubr.f32.gmra.mxu0 %v328
    %v515 = vpop.f32.mrf.mxu0
    %v516 = vadd.f32 %v131, %v515
    %v517 = vpop.f32.mrf.mxu0
    %518 = vmatprep.mubr.f32.mxu0 0.0
    %519 = vmatmul.mubr.f32.gmra.mxu0 %v331
    %v520 = vpop.f32.mrf.mxu0
    %v521 = vadd.f32 %v136, %v520
    %v522 = vpop.f32.mrf.mxu0
    %523 = vmatprep.mubr.f32.mxu0 0.0
    %524 = vmatmul.mubr.f32.gmra.mxu0 %v334
    %v525 = vpop.f32.mrf.mxu0
    %v526 = vadd.f32 %v141, %v525
    %v527 = vpop.f32.mrf.mxu0
    %528 = vmatprep.mubr.f32.mxu0 0.0
    %529 = vmatmul.mubr.f32.gmra.mxu0 %v337
    %v530 = vpop.f32.mrf.mxu0
    %v531 = vadd.f32 %v146, %v530
    %v532 = vpop.f32.mrf.mxu0
    %533 = vmatprep.mubr.f32.mxu0 0.0
    %534 = vmatmul.mubr.f32.gmra.mxu0 %v340
    %v535 = vpop.f32.mrf.mxu0
    %v536 = vadd.f32 %v151, %v535
    %v537 = vpop.f32.mrf.mxu0
    %538 = vmatprep.mubr.f32.mxu0 0.0
    %539 = vmatmul.mubr.f32.gmra.mxu0 %v343
    %v540 = vpop.f32.mrf.mxu0
    %v541 = vadd.f32 %v156, %v540
    %v542 = vpop.f32.mrf.mxu0
    %543 = vmatprep.mubr.f32.mxu0 0.0
    %544 = vmatmul.mubr.f32.gmra.mxu0 %v346
    %v545 = vpop.f32.mrf.mxu0
    %v546 = vadd.f32 %v161, %v545
    %v547 = vpop.f32.mrf.mxu0
    %548 = vmatprep.mubr.f32.mxu0 0.0
    %549 = vmatmul.mubr.f32.gmra.mxu0 %v349
    %v550 = vpop.f32.mrf.mxu0
    %v551 = vadd.f32 %v166, %v550
    %v552 = vpop.f32.mrf.mxu0
    %553 = vmatprep.mubr.f32.mxu0 0.0
    %554 = vmatmul.mubr.f32.gmra.mxu0 %v352
    %v555 = vpop.f32.mrf.mxu0
    %v556 = vadd.f32 %v171, %v555
    %v557 = vpop.f32.mrf.mxu0
    %558 = vmatprep.mubr.f32.mxu0 0.0
    %559 = vmatmul.mubr.f32.gmra.mxu0 %v355
    %v560 = vpop.f32.mrf.mxu0
    %v561 = vadd.f32 %v176, %v560
    %v562 = vpop.f32.mrf.mxu0
    %563 = vmatprep.mubr.f32.mxu0 0.0
    %564 = vmatmul.mubr.f32.gmra.mxu0 %v358
    %v565 = vpop.f32.mrf.mxu0
    %v566 = vadd.f32 %v181, %v565
    %v567 = vpop.f32.mrf.mxu0
    %568 = vmatprep.mubr.f32.mxu0 0.0
    %569 = vmatmul.mubr.f32.gmra.mxu0 %v361
    %v570 = vpop.f32.mrf.mxu0
    %v571 = vadd.f32 %v186, %v570
    %v572 = vpop.f32.mrf.mxu0
    %573 = vmatprep.mubr.f32.mxu0 0.0
    %574 = vmatmul.mubr.f32.gmra.mxu0 %v364
    %v575 = vpop.f32.mrf.mxu0
    %v576 = vadd.f32 %v191, %v575
    %v577 = vpop.f32.mrf.mxu0
    %578 = vmatprep.mubr.f32.mxu0 0.0
    %579 = vmatmul.mubr.f32.gmra.mxu0 %v367
    %v580 = vpop.f32.mrf.mxu0
    %v581 = vadd.f32 %v196, %v580
    %v582 = vpop.f32.mrf.mxu0
    %583 = vmatprep.mubr.f32.mxu0 0.0
    %584 = vmatmul.mubr.f32.gmra.mxu0 %v370
    %v585 = vpop.f32.mrf.mxu0
    %v586 = vadd.f32 %v201, %v585
    %v587 = vpop.f32.mrf.mxu0
    %588 = vmatprep.mubr.f32.mxu0 0.0
    %589 = vmatmul.mubr.f32.gmra.mxu0 %v373
    %v590 = vpop.f32.mrf.mxu0
    %v591 = vadd.f32 %v206, %v590
    %v592 = vpop.f32.mrf.mxu0
    %593 = vmatprep.mubr.f32.mxu0 0.0
    %594 = vmatmul.mubr.f32.gmra.mxu0 %v376
    %v595 = vpop.f32.mrf.mxu0
    %v596 = vadd.f32 %v211, %v595
    %v597 = vpop.f32.mrf.mxu0
    %598 = vmatprep.mubr.f32.mxu0 0.0
    %599 = vmatmul.mubr.f32.gmra.mxu0 %v379
    %v600 = vpop.f32.mrf.mxu0
    %v601 = vadd.f32 %v216, %v600
    %v602 = vpop.f32.mrf.mxu0
    %603 = vmatprep.mubr.f32.mxu0 0.0
    %604 = vmatmul.mubr.f32.gmra.mxu0 %v382
    %v605 = vpop.f32.mrf.mxu0
    %v606 = vadd.f32 %v221, %v605
    %v607 = vpop.f32.mrf.mxu0
    %608 = vmatprep.mubr.f32.mxu0 0.0
    %609 = vmatmul.mubr.f32.gmra.mxu0 %v385
    %v610 = vpop.f32.mrf.mxu0
    %v611 = vadd.f32 %v226, %v610
    %v612 = vpop.f32.mrf.mxu0
    %613 = vmatprep.mubr.f32.mxu0 0.0
    %614 = vmatmul.mubr.f32.gmra.mxu0 %v388
    %v615 = vpop.f32.mrf.mxu0
    %v616 = vadd.f32 %v231, %v615
    %v617 = vpop.f32.mrf.mxu0
    %618 = vmatprep.mubr.f32.mxu0 0.0
    %619 = vmatmul.mubr.f32.gmra.mxu0 %v391
    %v620 = vpop.f32.mrf.mxu0
    %v621 = vadd.f32 %v236, %v620
    %v622 = vpop.f32.mrf.mxu0
    %623 = vmatprep.mubr.f32.mxu0 0.0
    %624 = vmatmul.mubr.f32.gmra.mxu0 %v394
    %v625 = vpop.f32.mrf.mxu0
    %v626 = vadd.f32 %v241, %v625
    %v627 = vpop.f32.mrf.mxu0
    %628 = vmatprep.mubr.f32.mxu0 0.0
    %629 = vmatmul.mubr.f32.gmra.mxu0 %v397
    %v630 = vpop.f32.mrf.mxu0
    %v631 = vadd.f32 %v246, %v630
    %v632 = vpop.f32.mrf.mxu0
    %633 = vmatprep.mubr.f32.mxu0 0.0
    %634 = vmatmul.mubr.f32.gmra.mxu0 %v400
    %v635 = vpop.f32.mrf.mxu0
    %v636 = vadd.f32 %v251, %v635
    %v637 = vpop.f32.mrf.mxu0
    %638 = vmatprep.mubr.f32.mxu0 0.0
    %639 = vmatmul.mubr.f32.gmra.mxu0 %v403
    %v640 = vpop.f32.mrf.mxu0
    %v641 = vadd.f32 %v256, %v640
    %v642 = vpop.f32.mrf.mxu0
    %643 = vmatprep.mubr.f32.mxu0 0.0
    %644 = vmatmul.mubr.f32.gmra.mxu0 %v406
    %v645 = vpop.f32.mrf.mxu0
    %v646 = vadd.f32 %v261, %v645
    %v647 = vpop.f32.mrf.mxu0
    %648 = vmatprep.mubr.f32.mxu0 0.0
    %649 = vmatmul.mubr.f32.gmra.mxu0 %v409
    %v650 = vpop.f32.mrf.mxu0
    %v651 = vadd.f32 %v266, %v650
    %v652 = vpop.f32.mrf.mxu0
    %653 = vmatprep.mubr.f32.mxu0 0.0
    %654 = vmatmul.mubr.f32.gmra.mxu0 %v412
    %v655 = vpop.f32.mrf.mxu0
    %v656 = vadd.f32 %v271, %v655
    %v657 = vpop.f32.mrf.mxu0
    %658 = vmatprep.mubr.f32.mxu0 0.0
    %659 = vmatmul.mubr.f32.gmra.mxu0 %v415
    %v660 = vpop.f32.mrf.mxu0
    %v661 = vadd.f32 %v276, %v660
    %v662 = vpop.f32.mrf.mxu0
    %663 = vmatprep.mubr.f32.mxu0 0.0
    %664 = vmatmul.mubr.f32.gmra.mxu0 %v418
    %v665 = vpop.f32.mrf.mxu0
    %v666 = vadd.f32 %v281, %v665
    %v667 = vpop.f32.mrf.mxu0
    %668 = vmatprep.mubr.f32.mxu0 0.0
    %669 = vmatmul.mubr.f32.gmra.mxu0 %v421
    %v670 = vpop.f32.mrf.mxu0
    %v671 = vadd.f32 %v286, %v670
    %v672 = vpop.f32.mrf.mxu0
    %673 = vmatprep.mubr.f32.mxu0 0.0
    %674 = vmatmul.mubr.f32.gmra.mxu0 %v424
    %v675 = vpop.f32.mrf.mxu0
    %v676 = vadd.f32 %v291, %v675
    %v677 = vpop.f32.mrf.mxu0
    %678 = vmatprep.mubr.f32.mxu0 0.0
    %679 = vmatmul.mubr.f32.gmra.mxu0 %v427
    %v680 = vpop.f32.mrf.mxu0
    %v681 = vadd.f32 %v296, %v680
    %v682 = vpop.f32.mrf.mxu0
    %683 = vmatprep.mubr.f32.mxu0 0.0
    %684 = vmatmul.mubr.f32.gmra.mxu0 %v430
    %v685 = vpop.f32.mrf.mxu0
    %v686 = vadd.f32 %v301, %v685
    %v687 = vpop.f32.mrf.mxu0
    %688 = vmatprep.mubr.f32.mxu0 0.0
    %689 = vmatmul.mubr.f32.gmra.mxu0 %v433
    %v690 = vpop.f32.mrf.mxu0
    %v691 = vadd.f32 %v306, %v690
    %v692 = vpop.f32.mrf.mxu0
    %693 = vmatprep.mubr.f32.mxu0 0.0
    %694 = vmatmul.mubr.f32.gmra.mxu0 %v436
    %v695 = vpop.f32.mrf.mxu0
    %v696 = vadd.f32 %v311, %v695
    %v697 = vpop.f32.mrf.mxu0
    %698 = vmatprep.mubr.f32.mxu0 0.0
    %699 = vmatmul.mubr.f32.gmra.mxu0 %v439
    %v700 = vpop.f32.mrf.mxu0
    %v701 = vadd.f32 %v316, %v700
    %v702 = vpop.f32.mrf.mxu0
    %703 = vmatprep.mubr.f32.mxu0 0.0
    %704 = vmatmul.mubr.f32.gmra.mxu0 %v442
    %v705 = vpop.f32.mrf.mxu0
    %v706 = vadd.f32 %v321, %v705
    %v707 = vpop.f32.mrf.mxu0
    %708 = vdwg.mxu0
    %v709 = vmax.f32 %v511, 0.0
    %v710 = vmax.f32 %v516, 0.0
    %v711 = vmax.f32 %v521, 0.0
    %v712 = vmax.f32 %v526, 0.0
    %v713 = vmax.f32 %v531, 0.0
    %v714 = vmax.f32 %v536, 0.0
    %v715 = vmax.f32 %v541, 0.0
    %v716 = vmax.f32 %v546, 0.0
    %v717 = vmax.f32 %v551, 0.0
    %v718 = vmax.f32 %v556, 0.0
    %v719 = vmax.f32 %v561, 0.0
    %v720 = vmax.f32 %v566, 0.0
    %v721 = vmax.f32 %v571, 0.0
    %v722 = vmax.f32 %v576, 0.0
    %v723 = vmax.f32 %v581, 0.0
    %v724 = vmax.f32 %v586, 0.0
    %v725 = vmax.f32 %v591, 0.0
    %v726 = vmax.f32 %v596, 0.0
    %v727 = vmax.f32 %v601, 0.0
    %v728 = vmax.f32 %v606, 0.0
    %v729 = vmax.f32 %v611, 0.0
    %v730 = vmax.f32 %v616, 0.0
    %v731 = vmax.f32 %v621, 0.0
    %v732 = vmax.f32 %v626, 0.0
    %v733 = vmax.f32 %v631, 0.0
    %v734 = vmax.f32 %v636, 0.0
    %v735 = vmax.f32 %v641, 0.0
    %v736 = vmax.f32 %v646, 0.0
    %v737 = vmax.f32 %v651, 0.0
    %v738 = vmax.f32 %v656, 0.0
    %v739 = vmax.f32 %v661, 0.0
    %v740 = vmax.f32 %v666, 0.0
    %v741 = vmax.f32 %v671, 0.0
    %v742 = vmax.f32 %v676, 0.0
    %v743 = vmax.f32 %v681, 0.0
    %v744 = vmax.f32 %v686, 0.0
    %v745 = vmax.f32 %v691, 0.0
    %v746 = vmax.f32 %v696, 0.0
    %v747 = vmax.f32 %v701, 0.0
    %v748 = vmax.f32 %v706, 0.0
    %v749 = vld [vmem:[%s6] sm:$0x1]
    %v750 = vld [vmem:[#allocation2] sm:$0x1]
    %752 = vset.pattern.permute.xlu0 0
    %753 = vperm.xlu0 %752, %v750
    %v754 = vpop.permute.xlu0 %753
    %v756 = vlaneseq
    %v757 = vshrl.u32 %v756, 7
    %v758 = vsub.s32 0, %v757
    %v759 = vrot.slane %v754, %v758
    %vm760 = vcmask 523264
    %v762 = vsel %vm760, %v749, 0
    %764 = vmatprep.subr.mxu0 0.0
    %765 = vmatpush1.msra.mxu0 0.0
    %766 = vmatprep.subr.mxu0 0.0
    %767 = vmatpush1.msra.mxu0 0.0
    %768 = vmatprep.subr.mxu0 0.0
    %769 = vmatpush1.msra.mxu0 0.0
    %770 = vmatprep.subr.mxu0 0.0
    %771 = vmatpush1.msra.mxu0 0.0
    %772 = vmatprep.subr.mxu0 0.0
    %773 = vmatpush1.msra.mxu0 0.0
    %774 = vmatprep.subr.mxu0 0.0
    %775 = vmatpush1.msra.mxu0 0.0
    %776 = vmatprep.subr.mxu0 0.0
    %777 = vmatpush1.msra.mxu0 0.0
    %778 = vmatprep.subr.mxu0 0.0
    %779 = vmatpush1.msra.mxu0 0.0
    %780 = vmatprep.subr.mxu0 0.0
    %781 = vmatpush1.msra.mxu0 %v716
    %782 = vmatprep.subr.mxu0 0.0
    %783 = vmatpush1.msra.mxu0 %v715
    %784 = vmatprep.subr.mxu0 0.0
    %785 = vmatpush1.msra.mxu0 %v714
    %786 = vmatprep.subr.mxu0 0.0
    %787 = vmatpush1.msra.mxu0 %v713
    %788 = vmatprep.subr.mxu0 0.0
    %789 = vmatpush1.msra.mxu0 %v712
    %790 = vmatprep.subr.mxu0 0.0
    %791 = vmatpush1.msra.mxu0 %v711
    %792 = vmatprep.subr.mxu0 0.0
    %793 = vmatpush1.msra.mxu0 %v710
    %794 = vmatprep.subr.mxu0 0.0
    %795 = vmatpush1.msra.mxu0 %v709
    %796 = vmatprep.subr.mxu0 0.0
    %797 = vmatpush2.msra.mxu0 0.0
    %798 = vmatprep.subr.mxu0 0.0
    %799 = vmatpush2.msra.mxu0 0.0
    %800 = vmatprep.subr.mxu0 0.0
    %801 = vmatpush2.msra.mxu0 0.0
    %802 = vmatprep.subr.mxu0 0.0
    %803 = vmatpush2.msra.mxu0 0.0
    %804 = vmatprep.subr.mxu0 0.0
    %805 = vmatpush2.msra.mxu0 0.0
    %806 = vmatprep.subr.mxu0 0.0
    %807 = vmatpush2.msra.mxu0 0.0
    %808 = vmatprep.subr.mxu0 0.0
    %809 = vmatpush2.msra.mxu0 0.0
    %810 = vmatprep.subr.mxu0 0.0
    %811 = vmatpush2.msra.mxu0 0.0
    %812 = vmatprep.subr.mxu0 0.0
    %813 = vmatpush2.msra.mxu0 0.0
    %814 = vmatprep.subr.mxu0 0.0
    %815 = vmatpush2.msra.mxu0 0.0
    %816 = vmatprep.subr.mxu0 0.0
    %817 = vmatpush2.msra.mxu0 0.0
    %818 = vmatprep.subr.mxu0 0.0
    %819 = vmatpush2.msra.mxu0 0.0
    %820 = vmatprep.subr.mxu0 0.0
    %821 = vmatpush2.msra.mxu0 0.0
    %822 = vmatprep.subr.mxu0 0.0
    %823 = vmatpush2.msra.mxu0 0.0
    %824 = vmatprep.subr.mxu0 0.0
    %825 = vmatpush2.msra.mxu0 0.0
    %826 = vmatprep.subr.mxu0 0.0
    %827 = vmatpush2.msra.mxu0 0.0
    %828 = vmatprep.mubr.f32.mxu0 0.0
    %829 = vmatmul.mubr.f32.gmra.mxu0 %v762
    %v830 = vpop.f32.mrf.mxu0
    %v831 = vadd.f32 %v759, %v830
    %v832 = vpop.f32.mrf.mxu0
    %833 = vdwg.mxu0
    %v834 = vmul.f32 %v831, %v42
    %v835 = vld [vmem:[%s3] sm:$0xff]
    %v836 = vld [vmem:[%s3 + $0x8] sm:$0xff]
    %v837 = vld [vmem:[%s3 + $0x10] sm:$0xff]
    %v838 = vld [vmem:[%s3 + $0x18] sm:$0xff]
    %v839 = vld [vmem:[%s3 + $0x20] sm:$0xff]
    %v840 = vld [vmem:[%s3 + $0x28] sm:$0xff]
    %v841 = vld [vmem:[%s3 + $0x30] sm:$0xff]
    %v842 = vld [vmem:[%s3 + $0x38] sm:$0xff]
    %v844 = vsel %vm760, %v834, 0
    %846 = vmatprep.subr.mxu0 0.0
    %847 = vmatpush1.msra.mxu0 0.0
    %848 = vmatprep.subr.mxu0 0.0
    %849 = vmatpush1.msra.mxu0 0.0
    %850 = vmatprep.subr.mxu0 0.0
    %851 = vmatpush1.msra.mxu0 0.0
    %852 = vmatprep.subr.mxu0 0.0
    %853 = vmatpush1.msra.mxu0 0.0
    %854 = vmatprep.subr.mxu0 0.0
    %855 = vmatpush1.msra.mxu0 0.0
    %856 = vmatprep.subr.mxu0 0.0
    %857 = vmatpush1.msra.mxu0 0.0
    %858 = vmatprep.subr.mxu0 0.0
    %859 = vmatpush1.msra.mxu0 0.0
    %860 = vmatprep.subr.mxu0 0.0
    %861 = vmatpush1.msra.mxu0 0.0
    %862 = vmatprep.subr.mxu0 0.0
    %863 = vmatpush1.msra.mxu0 %v842
    %864 = vmatprep.subr.mxu0 0.0
    %865 = vmatpush1.msra.mxu0 %v841
    %866 = vmatprep.subr.mxu0 0.0
    %867 = vmatpush1.msra.mxu0 %v840
    %868 = vmatprep.subr.mxu0 0.0
    %869 = vmatpush1.msra.mxu0 %v839
    %870 = vmatprep.subr.mxu0 0.0
    %871 = vmatpush1.msra.mxu0 %v838
    %872 = vmatprep.subr.mxu0 0.0
    %873 = vmatpush1.msra.mxu0 %v837
    %874 = vmatprep.subr.mxu0 0.0
    %875 = vmatpush1.msra.mxu0 %v836
    %876 = vmatprep.subr.mxu0 0.0
    %877 = vmatpush1.msra.mxu0 %v835
    %878 = vmatprep.subr.mxu0 0.0
    %879 = vmatpush2.msra.mxu0 0.0
    %880 = vmatprep.subr.mxu0 0.0
    %881 = vmatpush2.msra.mxu0 0.0
    %882 = vmatprep.subr.mxu0 0.0
    %883 = vmatpush2.msra.mxu0 0.0
    %884 = vmatprep.subr.mxu0 0.0
    %885 = vmatpush2.msra.mxu0 0.0
    %886 = vmatprep.subr.mxu0 0.0
    %887 = vmatpush2.msra.mxu0 0.0
    %888 = vmatprep.subr.mxu0 0.0
    %889 = vmatpush2.msra.mxu0 0.0
    %890 = vmatprep.subr.mxu0 0.0
    %891 = vmatpush2.msra.mxu0 0.0
    %892 = vmatprep.subr.mxu0 0.0
    %893 = vmatpush2.msra.mxu0 0.0
    %894 = vmatprep.subr.mxu0 0.0
    %895 = vmatpush2.msra.mxu0 0.0
    %896 = vmatprep.subr.mxu0 0.0
    %897 = vmatpush2.msra.mxu0 0.0
    %898 = vmatprep.subr.mxu0 0.0
    %899 = vmatpush2.msra.mxu0 0.0
    %900 = vmatprep.subr.mxu0 0.0
    %901 = vmatpush2.msra.mxu0 0.0
    %902 = vmatprep.subr.mxu0 0.0
    %903 = vmatpush2.msra.mxu0 0.0
    %904 = vmatprep.subr.mxu0 0.0
    %905 = vmatpush2.msra.mxu0 0.0
    %906 = vmatprep.subr.mxu0 0.0
    %907 = vmatpush2.msra.mxu0 0.0
    %908 = vmatprep.subr.mxu0 0.0
    %909 = vmatpush2.msra.mxu0 0.0
    %910 = vmatprep.mubr.f32.mxu0 0.0
    %911 = vmatmul.mubr.f32.gmra.mxu0 %v844
    %v912 = vpop.f32.mrf.mxu0
    %v913 = vadd.f32 0.0, %v912
    %v914 = vpop.f32.mrf.mxu0
    %915 = vdwg.mxu0
    %v917 = vsel %vm760, %v42, 0
    %919 = vmatprep.subr.mxu0 0.0
    %920 = vmatpush1.msra.mxu0 0.0
    %921 = vmatprep.subr.mxu0 0.0
    %922 = vmatpush1.msra.mxu0 0.0
    %923 = vmatprep.subr.mxu0 0.0
    %924 = vmatpush1.msra.mxu0 0.0
    %925 = vmatprep.subr.mxu0 0.0
    %926 = vmatpush1.msra.mxu0 0.0
    %927 = vmatprep.subr.mxu0 0.0
    %928 = vmatpush1.msra.mxu0 0.0
    %929 = vmatprep.subr.mxu0 0.0
    %930 = vmatpush1.msra.mxu0 0.0
    %931 = vmatprep.subr.mxu0 0.0
    %932 = vmatpush1.msra.mxu0 0.0
    %933 = vmatprep.subr.mxu0 0.0
    %934 = vmatpush1.msra.mxu0 0.0
    %935 = vmatprep.subr.mxu0 0.0
    %936 = vmatpush1.msra.mxu0 %v842
    %937 = vmatprep.subr.mxu0 0.0
    %938 = vmatpush1.msra.mxu0 %v841
    %939 = vmatprep.subr.mxu0 0.0
    %940 = vmatpush1.msra.mxu0 %v840
    %941 = vmatprep.subr.mxu0 0.0
    %942 = vmatpush1.msra.mxu0 %v839
    %943 = vmatprep.subr.mxu0 0.0
    %944 = vmatpush1.msra.mxu0 %v838
    %945 = vmatprep.subr.mxu0 0.0
    %946 = vmatpush1.msra.mxu0 %v837
    %947 = vmatprep.subr.mxu0 0.0
    %948 = vmatpush1.msra.mxu0 %v836
    %949 = vmatprep.subr.mxu0 0.0
    %950 = vmatpush1.msra.mxu0 %v835
    %951 = vmatprep.subr.mxu0 0.0
    %952 = vmatpush2.msra.mxu0 0.0
    %953 = vmatprep.subr.mxu0 0.0
    %954 = vmatpush2.msra.mxu0 0.0
    %955 = vmatprep.subr.mxu0 0.0
    %956 = vmatpush2.msra.mxu0 0.0
    %957 = vmatprep.subr.mxu0 0.0
    %958 = vmatpush2.msra.mxu0 0.0
    %959 = vmatprep.subr.mxu0 0.0
    %960 = vmatpush2.msra.mxu0 0.0
    %961 = vmatprep.subr.mxu0 0.0
    %962 = vmatpush2.msra.mxu0 0.0
    %963 = vmatprep.subr.mxu0 0.0
    %964 = vmatpush2.msra.mxu0 0.0
    %965 = vmatprep.subr.mxu0 0.0
    %966 = vmatpush2.msra.mxu0 0.0
    %967 = vmatprep.subr.mxu0 0.0
    %968 = vmatpush2.msra.mxu0 0.0
    %969 = vmatprep.subr.mxu0 0.0
    %970 = vmatpush2.msra.mxu0 0.0
    %971 = vmatprep.subr.mxu0 0.0
    %972 = vmatpush2.msra.mxu0 0.0
    %973 = vmatprep.subr.mxu0 0.0
    %974 = vmatpush2.msra.mxu0 0.0
    %975 = vmatprep.subr.mxu0 0.0
    %976 = vmatpush2.msra.mxu0 0.0
    %977 = vmatprep.subr.mxu0 0.0
    %978 = vmatpush2.msra.mxu0 0.0
    %979 = vmatprep.subr.mxu0 0.0
    %980 = vmatpush2.msra.mxu0 0.0
    %981 = vmatprep.subr.mxu0 0.0
    %982 = vmatpush2.msra.mxu0 0.0
    %983 = vmatprep.mubr.f32.mxu0 0.0
    %984 = vmatmul.mubr.f32.gmra.mxu0 %v917
    %v985 = vpop.f32.mrf.mxu0
    %v986 = vadd.f32 0.0, %v985
    %v987 = vpop.f32.mrf.mxu0
    %988 = vdwg.mxu0
    %v989 = vmax.f32 %v986, 1.0
    %v990 = vrcp.pop %v989
    %v991 = vmul.f32 %v913, %v990
    %v992 = vld [vmem:[%s2] sm:$0x3]
    %vm993 = vcmask 15360
    %v995 = vsel %vm993, %v991, 0
    %vm997 = vcmask 1041408
    %v999 = vsel %vm997, %v992, 0
    %1001 = vmatprep.subr.mxu0 0.0
    %1002 = vmatpush1.msra.mxu0 0.0
    %1003 = vmatprep.subr.mxu0 0.0
    %1004 = vmatpush1.msra.mxu0 0.0
    %1005 = vmatprep.subr.mxu0 0.0
    %1006 = vmatpush1.msra.mxu0 0.0
    %1007 = vmatprep.subr.mxu0 0.0
    %1008 = vmatpush1.msra.mxu0 0.0
    %1009 = vmatprep.subr.mxu0 0.0
    %1010 = vmatpush1.msra.mxu0 0.0
    %1011 = vmatprep.subr.mxu0 0.0
    %1012 = vmatpush1.msra.mxu0 0.0
    %1013 = vmatprep.subr.mxu0 0.0
    %1014 = vmatpush1.msra.mxu0 0.0
    %1015 = vmatprep.subr.mxu0 0.0
    %1016 = vmatpush1.msra.mxu0 0.0
    %1017 = vmatprep.subr.mxu0 0.0
    %1018 = vmatpush1.msra.mxu0 0.0
    %1019 = vmatprep.subr.mxu0 0.0
    %1020 = vmatpush1.msra.mxu0 0.0
    %1021 = vmatprep.subr.mxu0 0.0
    %1022 = vmatpush1.msra.mxu0 0.0
    %1023 = vmatprep.subr.mxu0 0.0
    %1024 = vmatpush1.msra.mxu0 0.0
    %1025 = vmatprep.subr.mxu0 0.0
    %1026 = vmatpush1.msra.mxu0 0.0
    %1027 = vmatprep.subr.mxu0 0.0
    %1028 = vmatpush1.msra.mxu0 0.0
    %1029 = vmatprep.subr.mxu0 0.0
    %1030 = vmatpush1.msra.mxu0 0.0
    %1031 = vmatprep.subr.mxu0 0.0
    %1032 = vmatpush1.msra.mxu0 %v999
    %1033 = vmatprep.subr.mxu0 0.0
    %1034 = vmatpush2.msra.mxu0 0.0
    %1035 = vmatprep.subr.mxu0 0.0
    %1036 = vmatpush2.msra.mxu0 0.0
    %1037 = vmatprep.subr.mxu0 0.0
    %1038 = vmatpush2.msra.mxu0 0.0
    %1039 = vmatprep.subr.mxu0 0.0
    %1040 = vmatpush2.msra.mxu0 0.0
    %1041 = vmatprep.subr.mxu0 0.0
    %1042 = vmatpush2.msra.mxu0 0.0
    %1043 = vmatprep.subr.mxu0 0.0
    %1044 = vmatpush2.msra.mxu0 0.0
    %1045 = vmatprep.subr.mxu0 0.0
    %1046 = vmatpush2.msra.mxu0 0.0
    %1047 = vmatprep.subr.mxu0 0.0
    %1048 = vmatpush2.msra.mxu0 0.0
    %1049 = vmatprep.subr.mxu0 0.0
    %1050 = vmatpush2.msra.mxu0 0.0
    %1051 = vmatprep.subr.mxu0 0.0
    %1052 = vmatpush2.msra.mxu0 0.0
    %1053 = vmatprep.subr.mxu0 0.0
    %1054 = vmatpush2.msra.mxu0 0.0
    %1055 = vmatprep.subr.mxu0 0.0
    %1056 = vmatpush2.msra.mxu0 0.0
    %1057 = vmatprep.subr.mxu0 0.0
    %1058 = vmatpush2.msra.mxu0 0.0
    %1059 = vmatprep.subr.mxu0 0.0
    %1060 = vmatpush2.msra.mxu0 0.0
    %1061 = vmatprep.subr.mxu0 0.0
    %1062 = vmatpush2.msra.mxu0 0.0
    %1063 = vmatprep.subr.mxu0 0.0
    %1064 = vmatpush2.msra.mxu0 0.0
    %1065 = vmatprep.mubr.f32.mxu0 0.0
    %1066 = vmatmul.mubr.f32.gmra.mxu0 %v995
    %v1067 = vpop.f32.mrf.mxu0
    %v1068 = vadd.f32 0.0, %v1067
    %v1069 = vpop.f32.mrf.mxu0
    %1070 = vdwg.mxu0
    %v1071 = vld [vmem:[%s8] sm:$0xff]
    %v1072 = vld [vmem:[%s9] sm:$0xf]
    %1074 = vset.pattern.permute.xlu0 0
    %1075 = vperm.xlu0 %1074, %v1072
    %v1076 = vpop.permute.xlu0 %1075
    %v1079 = vcombine.high %v1071, %v1071
    %1081 = vmatprep.subr.mxu0 0.0
    %1082 = vmatpush1.msra.mxu0 %v732
    %1083 = vmatprep.subr.mxu0 0.0
    %1084 = vmatpush1.msra.mxu0 %v731
    %1085 = vmatprep.subr.mxu0 0.0
    %1086 = vmatpush1.msra.mxu0 %v730
    %1087 = vmatprep.subr.mxu0 0.0
    %1088 = vmatpush1.msra.mxu0 %v729
    %1089 = vmatprep.subr.mxu0 0.0
    %1090 = vmatpush1.msra.mxu0 %v728
    %1091 = vmatprep.subr.mxu0 0.0
    %1092 = vmatpush1.msra.mxu0 %v727
    %1093 = vmatprep.subr.mxu0 0.0
    %1094 = vmatpush1.msra.mxu0 %v726
    %1095 = vmatprep.subr.mxu0 0.0
    %1096 = vmatpush1.msra.mxu0 %v725
    %1097 = vmatprep.subr.mxu0 0.0
    %1098 = vmatpush1.msra.mxu0 %v724
    %1099 = vmatprep.subr.mxu0 0.0
    %1100 = vmatpush1.msra.mxu0 %v723
    %1101 = vmatprep.subr.mxu0 0.0
    %1102 = vmatpush1.msra.mxu0 %v722
    %1103 = vmatprep.subr.mxu0 0.0
    %1104 = vmatpush1.msra.mxu0 %v721
    %1105 = vmatprep.subr.mxu0 0.0
    %1106 = vmatpush1.msra.mxu0 %v720
    %1107 = vmatprep.subr.mxu0 0.0
    %1108 = vmatpush1.msra.mxu0 %v719
    %1109 = vmatprep.subr.mxu0 0.0
    %1110 = vmatpush1.msra.mxu0 %v718
    %1111 = vmatprep.subr.mxu0 0.0
    %1112 = vmatpush1.msra.mxu0 %v717
    %1113 = vmatprep.subr.mxu0 0.0
    %1114 = vmatpush2.msra.mxu0 %v748
    %1115 = vmatprep.subr.mxu0 0.0
    %1116 = vmatpush2.msra.mxu0 %v747
    %1117 = vmatprep.subr.mxu0 0.0
    %1118 = vmatpush2.msra.mxu0 %v746
    %1119 = vmatprep.subr.mxu0 0.0
    %1120 = vmatpush2.msra.mxu0 %v745
    %1121 = vmatprep.subr.mxu0 0.0
    %1122 = vmatpush2.msra.mxu0 %v744
    %1123 = vmatprep.subr.mxu0 0.0
    %1124 = vmatpush2.msra.mxu0 %v743
    %1125 = vmatprep.subr.mxu0 0.0
    %1126 = vmatpush2.msra.mxu0 %v742
    %1127 = vmatprep.subr.mxu0 0.0
    %1128 = vmatpush2.msra.mxu0 %v741
    %1129 = vmatprep.subr.mxu0 0.0
    %1130 = vmatpush2.msra.mxu0 %v740
    %1131 = vmatprep.subr.mxu0 0.0
    %1132 = vmatpush2.msra.mxu0 %v739
    %1133 = vmatprep.subr.mxu0 0.0
    %1134 = vmatpush2.msra.mxu0 %v738
    %1135 = vmatprep.subr.mxu0 0.0
    %1136 = vmatpush2.msra.mxu0 %v737
    %1137 = vmatprep.subr.mxu0 0.0
    %1138 = vmatpush2.msra.mxu0 %v736
    %1139 = vmatprep.subr.mxu0 0.0
    %1140 = vmatpush2.msra.mxu0 %v735
    %1141 = vmatprep.subr.mxu0 0.0
    %1142 = vmatpush2.msra.mxu0 %v734
    %1143 = vmatprep.subr.mxu0 0.0
    %1144 = vmatpush2.msra.mxu0 %v733
    %1145 = vmatprep.mubr.f32.mxu0 %v1079
    %1146 = vmatmul.mubr.f32.gmra.mxu0 %v1071
    %v1147 = vpop.f32.mrf.mxu0
    %v1148 = vadd.f32 %v1076, %v1147
    %v1149 = vpop.f32.mrf.mxu0
    %1150 = vdwg.mxu0
    %v1151 = vlaneseq
    %v1152 = vshrl.u32 %v1151, 7
    %v1153 = vsub.s32 0, %v1152
    %v1154 = vrot.slane %v1068, %v1153
    %v1155 = vadd.f32 %v1154, %v1148
    %vm1156 = vcmp.gt.f32.partialorder %v42, 0.5
    %v1157 = vsel %vm1156, 1, 0
    %v1158 = vlaneseq
    %v1159 = vshrl.u32 %v1158, 7
    %v1160 = vsub.s32 0, %v1159
    %v1161 = vrot.slane %v1157, %v1160
    %vm1162 = vcmp.eq.s32.totalorder %v1161, 1
    %v1163 = vsel %vm1162, %v1155, -inf
    %vm1164 = vcmask 519168
    %1165 = vst.msk [vmem:[#allocation3] sm:$0xf] %vm1164, %v1163
    // Predicated region
    $region42: #{tpu_custom_call.1} parent=1 // pred_check
      _
    $region43: #{tpu_custom_call.1} parent=1 // pred_check_branch
      %1167 = sbr.rel (0) target = $region45
    $region44: #{tpu_custom_call.1} parent=1 // pred_region
      %s1169 = ssub.s32 64, 64
      %1170 = vsyncadd [#allocation4], %s1169
      %s1172 = sshll.u32 [#allocation3], 4
      %s1173 = int_to_ptr.vmem [resolvable:$true] %s1172
      %1175 = dma.vmem_to_hbm [thread:$0]  %s1173, 64, %s10, [#allocation4]
    $region45: #{tpu_custom_call.1} parent=1 // pred_fallthru
      _
    // Predicated region
    $region46: #{tpu_custom_call.1} parent=1 // pred_check
      _
    $region47: #{tpu_custom_call.1} parent=1 // pred_check_branch
      %1177 = sbr.rel (0) target = $region49
    $region48: #{tpu_custom_call.1} parent=1 // pred_region
      %1178 = dma.done [#allocation4], 64
    $region49: #{tpu_custom_call.1} parent=1 // pred_fallthru
      _
    %1179 = vsyncpa [#allocation4], 1

</llo_original>
